<compile_context>
chip_gen: v5e
topology: v5e:2x2
jax: 0.10.0
libtpu: 0.0.40
codegen_flags: <defaults>
</compile_context>

<pallas_src>
import functools

import jax
import jax.numpy as jnp
from jax.experimental import pallas as pl
from jax.experimental.pallas import tpu as pltpu

LANE = 128      # vreg lane width
SUBLANE = 8     # vreg sublane count


def _round_up(x, m):
    return ((x + m - 1) // m) * m


def _pad2d(a, rows, cols):
    return jnp.pad(a, ((0, rows - a.shape[0]), (0, cols - a.shape[1])))


# --------------------------- Fused Pallas kernel -----------------------------

def fused_gnn_kernel(a_ref, x_ref,
                     w1_ref, b1_ref, w2_ref, b2_ref, w3_ref, b3_ref,
                     p_ref, wfc_ref, bfc_ref, o_ref):
    """relu(A(...A(A(X W1)+b1 ...)W3)+b3) -> mean-pool (P @ h) -> FC.

    Single grid step: every operand and the intermediate h live in VMEM/vregs
    for the whole kernel. MXU matmuls take bf16 inputs with f32 accumulation;
    bias + ReLU epilogues run in f32 on the VPU; the output store is a
    lane-dense (Gp x 128) f32 slab.
    """
    a = a_ref[...]                                    # [Np, Np] bf16, resident

    def gcn(h_bf16, w_ref, b_ref):
        hw = jnp.dot(h_bf16, w_ref[...], preferred_element_type=jnp.float32)
        agg = jnp.dot(a, hw.astype(jnp.bfloat16),
                      preferred_element_type=jnp.float32)
        return jnp.maximum(agg + b_ref[...], 0.0)     # f32 epilogue

    h = gcn(x_ref[...], w1_ref, b1_ref)
    h = gcn(h.astype(jnp.bfloat16), w2_ref, b2_ref)
    h = gcn(h.astype(jnp.bfloat16), w3_ref, b3_ref)

    pooled = jnp.dot(p_ref[...], h.astype(jnp.bfloat16),
                     preferred_element_type=jnp.float32)
    o_ref[...] = jnp.dot(pooled.astype(jnp.bfloat16), wfc_ref[...],
                         preferred_element_type=jnp.float32) + bfc_ref[...]


# ----------------------------- Forward wrapper --------------------------------

@jax.jit
def gnn_forward(params, x, a_hat, pool_mat):
    """x: [N, F_in] f32, a_hat: [N, N] f32, pool_mat: [G, N] f32 -> [G, F_out]."""
    n, f_in = x.shape
    g = pool_mat.shape[0]
    hidden = params["w1"].shape[1]
    out_dim = params["w_fc"].shape[1]

    np_ = _round_up(max(n, LANE), LANE)        # node dim (lanes of A_hat / P)
    gp = _round_up(max(g, SUBLANE), SUBLANE)   # graph dim (sublanes of output)
    fip = _round_up(max(f_in, LANE), LANE)
    hp = _round_up(max(hidden, LANE), LANE)
    op = _round_up(max(out_dim, LANE), LANE)

    bt = jnp.bfloat16
    a_p = _pad2d(a_hat, np_, np_).astype(bt)
    x_p = _pad2d(x, np_, fip).astype(bt)
    p_p = _pad2d(pool_mat, gp, np_).astype(bt)

    w1 = _pad2d(params["w1"], fip, hp).astype(bt)
    w2 = _pad2d(params["w2"], hp, hp).astype(bt)
    w3 = _pad2d(params["w3"], hp, hp).astype(bt)
    wfc = _pad2d(params["w_fc"], hp, op).astype(bt)
    b1 = _pad2d(params["b1"].reshape(1, -1), 1, hp)        # biases stay f32
    b2 = _pad2d(params["b2"].reshape(1, -1), 1, hp)
    b3 = _pad2d(params["b3"].reshape(1, -1), 1, hp)
    bfc = _pad2d(params["b_fc"].reshape(1, -1), 1, op)

    def spec(shape):
        return pl.BlockSpec(shape, lambda i: (0,) * len(shape))

    out = pl.pallas_call(
        fused_gnn_kernel,
        out_shape=jax.ShapeDtypeStruct((gp, op), jnp.float32),
        grid=(1,),
        in_specs=[spec(a_p.shape), spec(x_p.shape),
                  spec(w1.shape), spec(b1.shape),
                  spec(w2.shape), spec(b2.shape),
                  spec(w3.shape), spec(b3.shape),
                  spec(p_p.shape), spec(wfc.shape), spec(bfc.shape)],
        out_specs=spec((gp, op)),
        compiler_params=pltpu.CompilerParams(
            dimension_semantics=("arbitrary",)),
    )(a_p, x_p, w1, b1, w2, b2, w3, b3, p_p, wfc, bfc)

    return out[:g, :out_dim]


# --------------------------- Glue (plain JAX, built once) ---------------------

def normalized_adjacency(edge_index, num_nodes):
    """Dense D^-1/2 (A + I) D^-1/2, matching PyG GCNConv default normalization."""
    row, col = edge_index[0], edge_index[1]
    loops = jnp.arange(num_nodes, dtype=edge_index.dtype)
    row = jnp.concatenate([row, loops])
    col = jnp.concatenate([col, loops])
    deg = jnp.zeros((num_nodes,), jnp.float32).at[col].add(1.0)
    dinv = jnp.where(deg > 0, 1.0 / jnp.sqrt(deg), 0.0)
    norm = dinv[row] * dinv[col]
    # out[i] = sum over edges (j -> i) of norm * x_j  =>  A_hat[i, j] = norm
    return jnp.zeros((num_nodes, num_nodes), jnp.float32).at[col, row].add(norm)


def mean_pool_matrix(batch, num_graphs, num_nodes):
    onehot = (batch[None, :] == jnp.arange(num_graphs)[:, None]).astype(jnp.float32)
    counts = jnp.maximum(onehot.sum(axis=1, keepdims=True), 1.0)
    return onehot / counts  # [num_graphs, num_nodes]


def glorot(key, shape):
    fan_in, fan_out = shape
    limit = jnp.sqrt(6.0 / (fan_in + fan_out))
    return jax.random.uniform(key, shape, jnp.float32, -limit, limit)


def init_params(key, input_dim, hidden_dim, output_dim):
    ks = jax.random.split(key, 4)
    return {
        "w1": glorot(ks[0], (input_dim, hidden_dim)),
        "b1": jnp.zeros((hidden_dim,), jnp.float32),
        "w2": glorot(ks[1], (hidden_dim, hidden_dim)),
        "b2": jnp.zeros((hidden_dim,), jnp.float32),
        "w3": glorot(ks[2], (hidden_dim, hidden_dim)),
        "b3": jnp.zeros((hidden_dim,), jnp.float32),
        "w_fc": glorot(ks[3], (hidden_dim, output_dim)),
        "b_fc": jnp.zeros((output_dim,), jnp.float32),
    }


# --------------------------------- Main ---------------------------------------

if __name__ == "__main__":
    key = jax.random.PRNGKey(0)
    k_x, k_p = jax.random.split(key)

    # 2 graphs of 8 nodes each (N=16), input_dim=8, hidden=32, output=4
    num_graphs = 2
    nodes_per_graph = 8
    N = num_graphs * nodes_per_graph
    input_dim, hidden_dim, output_dim = 8, 32, 4

    x = jax.random.normal(k_x, (N, input_dim), jnp.float32)

    # bidirectional ring edges within each graph
    src, dst = [], []
    for g in range(num_graphs):
        base = g * nodes_per_graph
        for i in range(nodes_per_graph):
            a = base + i
            b = base + (i + 1) % nodes_per_graph
            src += [a, b]
            dst += [b, a]
    edge_index = jnp.array([src, dst], dtype=jnp.int32)  # [2, E]
    batch = jnp.repeat(jnp.arange(num_graphs, dtype=jnp.int32), nodes_per_graph)

    params = init_params(k_p, input_dim, hidden_dim, output_dim)

    # Graph structure is precomputed once and reused across forward calls.
    a_hat = normalized_adjacency(edge_index, N)
    pool_mat = mean_pool_matrix(batch, num_graphs, N)

    out = gnn_forward(params, x, a_hat, pool_mat)
    jax.block_until_ready(out)
    assert out.shape == (num_graphs, output_dim)
    print("KERNEL_OK")
</pallas_src>

<mosaic_0001>
module attributes {stable_mosaic.version = 11 : i64} {
  func.func @fused_gnn_kernel(%arg0: i32, %arg1: memref<128x128xbf16, #tpu.memory_space<vmem>>, %arg2: memref<128x128xbf16, #tpu.memory_space<vmem>>, %arg3: memref<128x128xbf16, #tpu.memory_space<vmem>>, %arg4: memref<1x128xf32, #tpu.memory_space<vmem>>, %arg5: memref<128x128xbf16, #tpu.memory_space<vmem>>, %arg6: memref<1x128xf32, #tpu.memory_space<vmem>>, %arg7: memref<128x128xbf16, #tpu.memory_space<vmem>>, %arg8: memref<1x128xf32, #tpu.memory_space<vmem>>, %arg9: memref<8x128xbf16, #tpu.memory_space<vmem>>, %arg10: memref<128x128xbf16, #tpu.memory_space<vmem>>, %arg11: memref<1x128xf32, #tpu.memory_space<vmem>>, %arg12: memref<8x128xf32, #tpu.memory_space<vmem>>) attributes {dimension_semantics = [#tpu.dimension_semantics<arbitrary>], iteration_bounds = array<i64: 1>, scalar_prefetch = 0 : i64, scratch_operands = 0 : i64, tpu.core_type = #tpu.core_type<tc>, window_params = [{pipeline_mode = #tpu.pipeline_mode<synchronous>, transform_indices = @transform_0, window_bounds = array<i64: 128, 128>}, {pipeline_mode = #tpu.pipeline_mode<synchronous>, transform_indices = @transform_1, window_bounds = array<i64: 128, 128>}, {pipeline_mode = #tpu.pipeline_mode<synchronous>, transform_indices = @transform_2, window_bounds = array<i64: 128, 128>}, {pipeline_mode = #tpu.pipeline_mode<synchronous>, transform_indices = @transform_3, window_bounds = array<i64: 1, 128>}, {pipeline_mode = #tpu.pipeline_mode<synchronous>, transform_indices = @transform_4, window_bounds = array<i64: 128, 128>}, {pipeline_mode = #tpu.pipeline_mode<synchronous>, transform_indices = @transform_5, window_bounds = array<i64: 1, 128>}, {pipeline_mode = #tpu.pipeline_mode<synchronous>, transform_indices = @transform_6, window_bounds = array<i64: 128, 128>}, {pipeline_mode = #tpu.pipeline_mode<synchronous>, transform_indices = @transform_7, window_bounds = array<i64: 1, 128>}, {pipeline_mode = #tpu.pipeline_mode<synchronous>, transform_indices = @transform_8, window_bounds = array<i64: 8, 128>}, {pipeline_mode = #tpu.pipeline_mode<synchronous>, transform_indices = @transform_9, window_bounds = array<i64: 128, 128>}, {pipeline_mode = #tpu.pipeline_mode<synchronous>, transform_indices = @transform_10, window_bounds = array<i64: 1, 128>}, {pipeline_mode = #tpu.pipeline_mode<synchronous>, transform_indices = @transform_11, window_bounds = array<i64: 8, 128>}]} {
    %c0 = arith.constant 0 : index
    %c0_0 = arith.constant 0 : index
    %0 = vector.load %arg1[%c0, %c0_0] : memref<128x128xbf16, #tpu.memory_space<vmem>>, vector<128x128xbf16>
    %c0_1 = arith.constant 0 : index
    %c0_2 = arith.constant 0 : index
    %1 = vector.load %arg2[%c0_1, %c0_2] : memref<128x128xbf16, #tpu.memory_space<vmem>>, vector<128x128xbf16>
    %c0_3 = arith.constant 0 : index
    %c0_4 = arith.constant 0 : index
    %2 = vector.load %arg3[%c0_3, %c0_4] : memref<128x128xbf16, #tpu.memory_space<vmem>>, vector<128x128xbf16>
    %cst = arith.constant dense<0.000000e+00> : vector<128x128xf32>
    %3 = tpu.matmul %1, %2, %cst {dimension_numbers = #tpu.dot_dimension_numbers<[1], [0], [0], [1], [0, 0, 1, 1], [], []>} : vector<128x128xbf16>, vector<128x128xbf16>, vector<128x128xf32> -> vector<128x128xf32>
    %4 = arith.truncf %3 : vector<128x128xf32> to vector<128x128xbf16>
    %cst_5 = arith.constant dense<0.000000e+00> : vector<128x128xf32>
    %5 = tpu.matmul %0, %4, %cst_5 {dimension_numbers = #tpu.dot_dimension_numbers<[1], [0], [0], [1], [0, 0, 1, 1], [], []>} : vector<128x128xbf16>, vector<128x128xbf16>, vector<128x128xf32> -> vector<128x128xf32>
    %c0_6 = arith.constant 0 : index
    %c0_7 = arith.constant 0 : index
    %6 = vector.load %arg4[%c0_6, %c0_7] : memref<1x128xf32, #tpu.memory_space<vmem>>, vector<1x128xf32>
    %7 = vector.broadcast %6 : vector<1x128xf32> to vector<128x128xf32>
    %8 = arith.addf %5, %7 : vector<128x128xf32>
    %cst_8 = arith.constant 0.000000e+00 : f32
    %9 = vector.broadcast %cst_8 : f32 to vector<128x128xf32>
    %10 = arith.maximumf %8, %9 : vector<128x128xf32>
    %11 = arith.truncf %10 : vector<128x128xf32> to vector<128x128xbf16>
    %c0_9 = arith.constant 0 : index
    %c0_10 = arith.constant 0 : index
    %12 = vector.load %arg5[%c0_9, %c0_10] : memref<128x128xbf16, #tpu.memory_space<vmem>>, vector<128x128xbf16>
    %cst_11 = arith.constant dense<0.000000e+00> : vector<128x128xf32>
    %13 = tpu.matmul %11, %12, %cst_11 {dimension_numbers = #tpu.dot_dimension_numbers<[1], [0], [0], [1], [0, 0, 1, 1], [], []>} : vector<128x128xbf16>, vector<128x128xbf16>, vector<128x128xf32> -> vector<128x128xf32>
    %14 = arith.truncf %13 : vector<128x128xf32> to vector<128x128xbf16>
    %cst_12 = arith.constant dense<0.000000e+00> : vector<128x128xf32>
    %15 = tpu.matmul %0, %14, %cst_12 {dimension_numbers = #tpu.dot_dimension_numbers<[1], [0], [0], [1], [0, 0, 1, 1], [], []>} : vector<128x128xbf16>, vector<128x128xbf16>, vector<128x128xf32> -> vector<128x128xf32>
    %c0_13 = arith.constant 0 : index
    %c0_14 = arith.constant 0 : index
    %16 = vector.load %arg6[%c0_13, %c0_14] : memref<1x128xf32, #tpu.memory_space<vmem>>, vector<1x128xf32>
    %17 = vector.broadcast %16 : vector<1x128xf32> to vector<128x128xf32>
    %18 = arith.addf %15, %17 : vector<128x128xf32>
    %cst_15 = arith.constant 0.000000e+00 : f32
    %19 = vector.broadcast %cst_15 : f32 to vector<128x128xf32>
    %20 = arith.maximumf %18, %19 : vector<128x128xf32>
    %21 = arith.truncf %20 : vector<128x128xf32> to vector<128x128xbf16>
    %c0_16 = arith.constant 0 : index
    %c0_17 = arith.constant 0 : index
    %22 = vector.load %arg7[%c0_16, %c0_17] : memref<128x128xbf16, #tpu.memory_space<vmem>>, vector<128x128xbf16>
    %cst_18 = arith.constant dense<0.000000e+00> : vector<128x128xf32>
    %23 = tpu.matmul %21, %22, %cst_18 {dimension_numbers = #tpu.dot_dimension_numbers<[1], [0], [0], [1], [0, 0, 1, 1], [], []>} : vector<128x128xbf16>, vector<128x128xbf16>, vector<128x128xf32> -> vector<128x128xf32>
    %24 = arith.truncf %23 : vector<128x128xf32> to vector<128x128xbf16>
    %cst_19 = arith.constant dense<0.000000e+00> : vector<128x128xf32>
    %25 = tpu.matmul %0, %24, %cst_19 {dimension_numbers = #tpu.dot_dimension_numbers<[1], [0], [0], [1], [0, 0, 1, 1], [], []>} : vector<128x128xbf16>, vector<128x128xbf16>, vector<128x128xf32> -> vector<128x128xf32>
    %c0_20 = arith.constant 0 : index
    %c0_21 = arith.constant 0 : index
    %26 = vector.load %arg8[%c0_20, %c0_21] : memref<1x128xf32, #tpu.memory_space<vmem>>, vector<1x128xf32>
    %27 = vector.broadcast %26 : vector<1x128xf32> to vector<128x128xf32>
    %28 = arith.addf %25, %27 : vector<128x128xf32>
    %cst_22 = arith.constant 0.000000e+00 : f32
    %29 = vector.broadcast %cst_22 : f32 to vector<128x128xf32>
    %30 = arith.maximumf %28, %29 : vector<128x128xf32>
    %c0_23 = arith.constant 0 : index
    %c0_24 = arith.constant 0 : index
    %31 = vector.load %arg9[%c0_23, %c0_24] : memref<8x128xbf16, #tpu.memory_space<vmem>>, vector<8x128xbf16>
    %32 = arith.truncf %30 : vector<128x128xf32> to vector<128x128xbf16>
    %cst_25 = arith.constant dense<0.000000e+00> : vector<8x128xf32>
    %33 = tpu.matmul %31, %32, %cst_25 {dimension_numbers = #tpu.dot_dimension_numbers<[1], [0], [0], [1], [0, 0, 1, 1], [], []>} : vector<8x128xbf16>, vector<128x128xbf16>, vector<8x128xf32> -> vector<8x128xf32>
    %34 = arith.truncf %33 : vector<8x128xf32> to vector<8x128xbf16>
    %c0_26 = arith.constant 0 : index
    %c0_27 = arith.constant 0 : index
    %35 = vector.load %arg10[%c0_26, %c0_27] : memref<128x128xbf16, #tpu.memory_space<vmem>>, vector<128x128xbf16>
    %cst_28 = arith.constant dense<0.000000e+00> : vector<8x128xf32>
    %36 = tpu.matmul %34, %35, %cst_28 {dimension_numbers = #tpu.dot_dimension_numbers<[1], [0], [0], [1], [0, 0, 1, 1], [], []>} : vector<8x128xbf16>, vector<128x128xbf16>, vector<8x128xf32> -> vector<8x128xf32>
    %c0_29 = arith.constant 0 : index
    %c0_30 = arith.constant 0 : index
    %37 = vector.load %arg11[%c0_29, %c0_30] : memref<1x128xf32, #tpu.memory_space<vmem>>, vector<1x128xf32>
    %38 = vector.broadcast %37 : vector<1x128xf32> to vector<8x128xf32>
    %39 = arith.addf %36, %38 : vector<8x128xf32>
    %c0_31 = arith.constant 0 : index
    %c0_32 = arith.constant 0 : index
    %40 = vector.load %arg12[%c0_31, %c0_32] : memref<8x128xf32, #tpu.memory_space<vmem>>, vector<8x128xf32>
    tpu.vector_store %arg12[%c0_31, %c0_32], %39 {strides = array<i32>} : memref<8x128xf32, #tpu.memory_space<vmem>>, vector<8x128xf32>,
    return
  }
  func.func @transform_0(%arg0: i32) -> (i32, i32) {
    %c0_i32 = arith.constant 0 : i32
    %c0_i32_0 = arith.constant 0 : i32
    %c0_i32_1 = arith.constant 0 : i32
    return %c0_i32, %c0_i32_0 : i32, i32
  }
  func.func @transform_1(%arg0: i32) -> (i32, i32) {
    %c0_i32 = arith.constant 0 : i32
    %c0_i32_0 = arith.constant 0 : i32
    %c0_i32_1 = arith.constant 0 : i32
    return %c0_i32, %c0_i32_0 : i32, i32
  }
  func.func @transform_2(%arg0: i32) -> (i32, i32) {
    %c0_i32 = arith.constant 0 : i32
    %c0_i32_0 = arith.constant 0 : i32
    %c0_i32_1 = arith.constant 0 : i32
    return %c0_i32, %c0_i32_0 : i32, i32
  }
  func.func @transform_3(%arg0: i32) -> (i32, i32) {
    %c0_i32 = arith.constant 0 : i32
    %c0_i32_0 = arith.constant 0 : i32
    %c0_i32_1 = arith.constant 0 : i32
    return %c0_i32, %c0_i32_0 : i32, i32
  }
  func.func @transform_4(%arg0: i32) -> (i32, i32) {
    %c0_i32 = arith.constant 0 : i32
    %c0_i32_0 = arith.constant 0 : i32
    %c0_i32_1 = arith.constant 0 : i32
    return %c0_i32, %c0_i32_0 : i32, i32
  }
  func.func @transform_5(%arg0: i32) -> (i32, i32) {
    %c0_i32 = arith.constant 0 : i32
    %c0_i32_0 = arith.constant 0 : i32
    %c0_i32_1 = arith.constant 0 : i32
    return %c0_i32, %c0_i32_0 : i32, i32
  }
  func.func @transform_6(%arg0: i32) -> (i32, i32) {
    %c0_i32 = arith.constant 0 : i32
    %c0_i32_0 = arith.constant 0 : i32
    %c0_i32_1 = arith.constant 0 : i32
    return %c0_i32, %c0_i32_0 : i32, i32
  }
  func.func @transform_7(%arg0: i32) -> (i32, i32) {
    %c0_i32 = arith.constant 0 : i32
    %c0_i32_0 = arith.constant 0 : i32
    %c0_i32_1 = arith.constant 0 : i32
    return %c0_i32, %c0_i32_0 : i32, i32
  }
  func.func @transform_8(%arg0: i32) -> (i32, i32) {
    %c0_i32 = arith.constant 0 : i32
    %c0_i32_0 = arith.constant 0 : i32
    %c0_i32_1 = arith.constant 0 : i32
    return %c0_i32, %c0_i32_0 : i32, i32
  }
  func.func @transform_9(%arg0: i32) -> (i32, i32) {
    %c0_i32 = arith.constant 0 : i32
    %c0_i32_0 = arith.constant 0 : i32
    %c0_i32_1 = arith.constant 0 : i32
    return %c0_i32, %c0_i32_0 : i32, i32
  }
  func.func @transform_10(%arg0: i32) -> (i32, i32) {
    %c0_i32 = arith.constant 0 : i32
    %c0_i32_0 = arith.constant 0 : i32
    %c0_i32_1 = arith.constant 0 : i32
    return %c0_i32, %c0_i32_0 : i32, i32
  }
  func.func @transform_11(%arg0: i32) -> (i32, i32) {
    %c0_i32 = arith.constant 0 : i32
    %c0_i32_0 = arith.constant 0 : i32
    %c0_i32_1 = arith.constant 0 : i32
    return %c0_i32, %c0_i32_0 : i32, i32
  }
}

</mosaic_0001>

<llo_original>
// kernel: gnn_forward.1
$region0: #{gnn_forward.1}
  #allocation0 [shape = 'u32[]', space=smem, size = 0x4, offset = 0x4, fixed_abs, tag = 'smem constant byte address 0x4 - core index']
  #allocation1 [shape = 'u32[72,128]{1,0:T(1,128)}', space=vmem, size = 0x9000, scoped, tag = 'internal scratch']
  %s0 = inlined_call_operand.vmem [shape: bf16[128,128], index: 0, kind: input, shape index: {}]
  %s1 = inlined_call_operand.vmem [shape: bf16[128,128], index: 1, kind: input, shape index: {}]
  %s2 = inlined_call_operand.vmem [shape: bf16[128,128], index: 2, kind: input, shape index: {}]
  %s3 = inlined_call_operand.vmem [shape: f32[1,128], index: 3, kind: input, shape index: {}]
  %s4 = inlined_call_operand.vmem [shape: bf16[128,128], index: 4, kind: input, shape index: {}]
  %s5 = inlined_call_operand.vmem [shape: f32[1,128], index: 5, kind: input, shape index: {}]
  %s6 = inlined_call_operand.vmem [shape: bf16[128,128], index: 6, kind: input, shape index: {}]
  %s7 = inlined_call_operand.vmem [shape: f32[1,128], index: 7, kind: input, shape index: {}]
  %s8 = inlined_call_operand.vmem [shape: bf16[8,128], index: 8, kind: input, shape index: {}]
  %s9 = inlined_call_operand.vmem [shape: bf16[128,128], index: 9, kind: input, shape index: {}]
  %s10 = inlined_call_operand.vmem [shape: f32[1,128], index: 10, kind: input, shape index: {}]
  %s11 = inlined_call_operand.vmem [shape: f32[8,128], index: 11, kind: output, shape index: {}]
  %s12 = sld [smem:[#allocation0]]
  $region54: #{gnn_forward.1} parent=0
    _
  %s14 = ssub.s32 1, %s12
  %s15 = scalar_select 0, %s14, %s12
  // Predicated region
  $region2: #{gnn_forward.1} parent=0 // pred_check
    _
  $region3: #{gnn_forward.1} parent=0 // pred_check_branch
    %17 = sbr.rel (0) target = $region5
  $region4: #{gnn_forward.1} parent=0 // pred_region
    _
  $region5: #{gnn_forward.1} parent=0 // pred_fallthru
    _
  // Predicated region
  $region6: #{gnn_forward.1} parent=0 // pred_check
    _
  $region7: #{gnn_forward.1} parent=0 // pred_check_branch
    %19 = sbr.rel (0) target = $region9
  $region8: #{gnn_forward.1} parent=0 // pred_region
    _
  $region9: #{gnn_forward.1} parent=0 // pred_fallthru
    _
  // Predicated region
  $region10: #{gnn_forward.1} parent=0 // pred_check
    _
  $region11: #{gnn_forward.1} parent=0 // pred_check_branch
    %21 = sbr.rel (0) target = $region13
  $region12: #{gnn_forward.1} parent=0 // pred_region
    _
  $region13: #{gnn_forward.1} parent=0 // pred_fallthru
    _
  // Predicated region
  $region14: #{gnn_forward.1} parent=0 // pred_check
    _
  $region15: #{gnn_forward.1} parent=0 // pred_check_branch
    %23 = sbr.rel (0) target = $region17
  $region16: #{gnn_forward.1} parent=0 // pred_region
    _
  $region17: #{gnn_forward.1} parent=0 // pred_fallthru
    _
  // Predicated region
  $region18: #{gnn_forward.1} parent=0 // pred_check
    _
  $region19: #{gnn_forward.1} parent=0 // pred_check_branch
    %25 = sbr.rel (0) target = $region21
  $region20: #{gnn_forward.1} parent=0 // pred_region
    _
  $region21: #{gnn_forward.1} parent=0 // pred_fallthru
    _
  // Predicated region
  $region22: #{gnn_forward.1} parent=0 // pred_check
    _
  $region23: #{gnn_forward.1} parent=0 // pred_check_branch
    %27 = sbr.rel (0) target = $region25
  $region24: #{gnn_forward.1} parent=0 // pred_region
    _
  $region25: #{gnn_forward.1} parent=0 // pred_fallthru
    _
  // Predicated region
  $region26: #{gnn_forward.1} parent=0 // pred_check
    _
  $region27: #{gnn_forward.1} parent=0 // pred_check_branch
    %29 = sbr.rel (0) target = $region29
  $region28: #{gnn_forward.1} parent=0 // pred_region
    _
  $region29: #{gnn_forward.1} parent=0 // pred_fallthru
    _
  // Predicated region
  $region30: #{gnn_forward.1} parent=0 // pred_check
    _
  $region31: #{gnn_forward.1} parent=0 // pred_check_branch
    %31 = sbr.rel (0) target = $region33
  $region32: #{gnn_forward.1} parent=0 // pred_region
    _
  $region33: #{gnn_forward.1} parent=0 // pred_fallthru
    _
  // Predicated region
  $region34: #{gnn_forward.1} parent=0 // pred_check
    _
  $region35: #{gnn_forward.1} parent=0 // pred_check_branch
    %33 = sbr.rel (0) target = $region37
  $region36: #{gnn_forward.1} parent=0 // pred_region
    _
  $region37: #{gnn_forward.1} parent=0 // pred_fallthru
    _
  // Predicated region
  $region38: #{gnn_forward.1} parent=0 // pred_check
    _
  $region39: #{gnn_forward.1} parent=0 // pred_check_branch
    %35 = sbr.rel (0) target = $region41
  $region40: #{gnn_forward.1} parent=0 // pred_region
    _
  $region41: #{gnn_forward.1} parent=0 // pred_fallthru
    _
  // Predicated region
  $region42: #{gnn_forward.1} parent=0 // pred_check
    _
  $region43: #{gnn_forward.1} parent=0 // pred_check_branch
    %37 = sbr.rel (0) target = $region45
  $region44: #{gnn_forward.1} parent=0 // pred_region
    _
  $region45: #{gnn_forward.1} parent=0 // pred_fallthru
    _
  %v38 = vld [vmem:[%s0] sm:$0xf]
  %v39 = vld [vmem:[%s0 + $0x4] sm:$0xf]
  %v40 = vld [vmem:[%s0 + $0x8] sm:$0xf]
  %v41 = vld [vmem:[%s0 + $0xc] sm:$0xf]
  %v42 = vld [vmem:[%s0 + $0x10] sm:$0xf]
  %v43 = vld [vmem:[%s0 + $0x14] sm:$0xf]
  %v44 = vld [vmem:[%s0 + $0x18] sm:$0xf]
  %v45 = vld [vmem:[%s0 + $0x1c] sm:$0xf]
  %v46 = vld [vmem:[%s0 + $0x20] sm:$0xf]
  %v47 = vld [vmem:[%s0 + $0x24] sm:$0xf]
  %v48 = vld [vmem:[%s0 + $0x28] sm:$0xf]
  %v49 = vld [vmem:[%s0 + $0x2c] sm:$0xf]
  %v50 = vld [vmem:[%s0 + $0x30] sm:$0xf]
  %v51 = vld [vmem:[%s0 + $0x34] sm:$0xf]
  %v52 = vld [vmem:[%s0 + $0x38] sm:$0xf]
  %v53 = vld [vmem:[%s0 + $0x3c] sm:$0xf]
  %v54 = vld [vmem:[%s1] sm:$0xf]
  %v55 = vld [vmem:[%s1 + $0x4] sm:$0xf]
  %v56 = vld [vmem:[%s1 + $0x8] sm:$0xf]
  %v57 = vld [vmem:[%s1 + $0xc] sm:$0xf]
  %v58 = vld [vmem:[%s1 + $0x10] sm:$0xf]
  %v59 = vld [vmem:[%s1 + $0x14] sm:$0xf]
  %v60 = vld [vmem:[%s1 + $0x18] sm:$0xf]
  %v61 = vld [vmem:[%s1 + $0x1c] sm:$0xf]
  %v62 = vld [vmem:[%s1 + $0x20] sm:$0xf]
  %v63 = vld [vmem:[%s1 + $0x24] sm:$0xf]
  %v64 = vld [vmem:[%s1 + $0x28] sm:$0xf]
  %v65 = vld [vmem:[%s1 + $0x2c] sm:$0xf]
  %v66 = vld [vmem:[%s1 + $0x30] sm:$0xf]
  %v67 = vld [vmem:[%s1 + $0x34] sm:$0xf]
  %v68 = vld [vmem:[%s1 + $0x38] sm:$0xf]
  %v69 = vld [vmem:[%s1 + $0x3c] sm:$0xf]
  %v70 = vld [vmem:[%s2] sm:$0xf]
  %v71 = vld [vmem:[%s2 + $0x4] sm:$0xf]
  %v72 = vld [vmem:[%s2 + $0x8] sm:$0xf]
  %v73 = vld [vmem:[%s2 + $0xc] sm:$0xf]
  %v74 = vld [vmem:[%s2 + $0x10] sm:$0xf]
  %v75 = vld [vmem:[%s2 + $0x14] sm:$0xf]
  %v76 = vld [vmem:[%s2 + $0x18] sm:$0xf]
  %v77 = vld [vmem:[%s2 + $0x1c] sm:$0xf]
  %v78 = vld [vmem:[%s2 + $0x20] sm:$0xf]
  %v79 = vld [vmem:[%s2 + $0x24] sm:$0xf]
  %v80 = vld [vmem:[%s2 + $0x28] sm:$0xf]
  %v81 = vld [vmem:[%s2 + $0x2c] sm:$0xf]
  %v82 = vld [vmem:[%s2 + $0x30] sm:$0xf]
  %v83 = vld [vmem:[%s2 + $0x34] sm:$0xf]
  %v84 = vld [vmem:[%s2 + $0x38] sm:$0xf]
  %v85 = vld [vmem:[%s2 + $0x3c] sm:$0xf]
  %v102 = vunpack.c.l.b16 %v54
  %v103 = vunpack.c.l.b16 %v55
  %v104 = vunpack.c.l.b16 %v56
  %v105 = vunpack.c.l.b16 %v57
  %v106 = vunpack.c.l.b16 %v58
  %v107 = vunpack.c.l.b16 %v59
  %v108 = vunpack.c.l.b16 %v60
  %v109 = vunpack.c.l.b16 %v61
  %v110 = vunpack.c.l.b16 %v62
  %v111 = vunpack.c.l.b16 %v63
  %v112 = vunpack.c.l.b16 %v64
  %v113 = vunpack.c.l.b16 %v65
  %v114 = vunpack.c.l.b16 %v66
  %v115 = vunpack.c.l.b16 %v67
  %v116 = vunpack.c.l.b16 %v68
  %v117 = vunpack.c.l.b16 %v69
  %v118 = vpack.c.b16 %v103, %v102
  %v119 = vpack.c.b16 %v105, %v104
  %v120 = vpack.c.b16 %v107, %v106
  %v121 = vpack.c.b16 %v109, %v108
  %v122 = vpack.c.b16 %v111, %v110
  %v123 = vpack.c.b16 %v113, %v112
  %v124 = vpack.c.b16 %v115, %v114
  %v125 = vpack.c.b16 %v117, %v116
  %v150 = vunpack.c.l.b16 %v70
  %v151 = vunpack.c.l.b16 %v71
  %v152 = vunpack.c.l.b16 %v72
  %v153 = vunpack.c.l.b16 %v73
  %v154 = vunpack.c.l.b16 %v74
  %v155 = vunpack.c.l.b16 %v75
  %v156 = vunpack.c.l.b16 %v76
  %v157 = vunpack.c.l.b16 %v77
  %v158 = vunpack.c.l.b16 %v78
  %v159 = vunpack.c.l.b16 %v79
  %v160 = vunpack.c.l.b16 %v80
  %v161 = vunpack.c.l.b16 %v81
  %v162 = vunpack.c.l.b16 %v82
  %v163 = vunpack.c.l.b16 %v83
  %v164 = vunpack.c.l.b16 %v84
  %v165 = vunpack.c.l.b16 %v85
  %v166 = vpack.c.b16 %v151, %v150
  %v167 = vpack.c.b16 %v153, %v152
  %v168 = vpack.c.b16 %v155, %v154
  %v169 = vpack.c.b16 %v157, %v156
  %v170 = vpack.c.b16 %v159, %v158
  %v171 = vpack.c.b16 %v161, %v160
  %v172 = vpack.c.b16 %v163, %v162
  %v173 = vpack.c.b16 %v165, %v164
  %182 = vmatpush.bf16.msra.mxu0 %v173
  %183 = vmatpush.bf16.msra.mxu0 %v172
  %184 = vmatpush.bf16.msra.mxu0 %v171
  %185 = vmatpush.bf16.msra.mxu0 %v170
  %186 = vmatpush.bf16.msra.mxu0 %v169
  %187 = vmatpush.bf16.msra.mxu0 %v168
  %188 = vmatpush.bf16.msra.mxu0 %v167
  %189 = vmatpush.bf16.msra.mxu0 %v166
  %190 = vmatmul.bf16.gmra.mxu0 %v118
  %v191 = vpop.f32.mrf.mxu0
  %v192 = vadd.f32 0.0, %v191
  %v193 = vpop.f32.mrf.mxu0
  %v194 = vadd.f32 0.0, %v193
  %195 = vmatmul.bf16.gmra.mxu0 %v119
  %v196 = vpop.f32.mrf.mxu0
  %v197 = vadd.f32 0.0, %v196
  %v198 = vpop.f32.mrf.mxu0
  %v199 = vadd.f32 0.0, %v198
  %200 = vmatmul.bf16.gmra.mxu0 %v120
  %v201 = vpop.f32.mrf.mxu0
  %v202 = vadd.f32 0.0, %v201
  %v203 = vpop.f32.mrf.mxu0
  %v204 = vadd.f32 0.0, %v203
  %205 = vmatmul.bf16.gmra.mxu0 %v121
  %v206 = vpop.f32.mrf.mxu0
  %v207 = vadd.f32 0.0, %v206
  %v208 = vpop.f32.mrf.mxu0
  %v209 = vadd.f32 0.0, %v208
  %210 = vmatmul.bf16.gmra.mxu0 %v122
  %v211 = vpop.f32.mrf.mxu0
  %v212 = vadd.f32 0.0, %v211
  %v213 = vpop.f32.mrf.mxu0
  %v214 = vadd.f32 0.0, %v213
  %215 = vmatmul.bf16.gmra.mxu0 %v123
  %v216 = vpop.f32.mrf.mxu0
  %v217 = vadd.f32 0.0, %v216
  %v218 = vpop.f32.mrf.mxu0
  %v219 = vadd.f32 0.0, %v218
  %220 = vmatmul.bf16.gmra.mxu0 %v124
  %v221 = vpop.f32.mrf.mxu0
  %v222 = vadd.f32 0.0, %v221
  %v223 = vpop.f32.mrf.mxu0
  %v224 = vadd.f32 0.0, %v223
  %225 = vmatmul.bf16.gmra.mxu0 %v125
  %v226 = vpop.f32.mrf.mxu0
  %v227 = vadd.f32 0.0, %v226
  %v228 = vpop.f32.mrf.mxu0
  %v229 = vadd.f32 0.0, %v228
  %230 = vdwg.mxu0
  %v231 = vpack.c.bf16 %v194, %v192
  %v232 = vpack.c.bf16 %v199, %v197
  %v233 = vpack.c.bf16 %v204, %v202
  %v234 = vpack.c.bf16 %v209, %v207
  %v235 = vpack.c.bf16 %v214, %v212
  %v236 = vpack.c.bf16 %v219, %v217
  %v237 = vpack.c.bf16 %v224, %v222
  %v238 = vpack.c.bf16 %v229, %v227
  %v239 = vld [vmem:[%s3] sm:$0x1]
  %v241 = vperm.slane %v239, 0
  %v259 = vunpack.c.l.b16 %v38
  %v260 = vunpack.c.l.b16 %v39
  %v261 = vunpack.c.l.b16 %v40
  %v262 = vunpack.c.l.b16 %v41
  %v263 = vunpack.c.l.b16 %v42
  %v264 = vunpack.c.l.b16 %v43
  %v265 = vunpack.c.l.b16 %v44
  %v266 = vunpack.c.l.b16 %v45
  %v267 = vunpack.c.l.b16 %v46
  %v268 = vunpack.c.l.b16 %v47
  %v269 = vunpack.c.l.b16 %v48
  %v270 = vunpack.c.l.b16 %v49
  %v271 = vunpack.c.l.b16 %v50
  %v272 = vunpack.c.l.b16 %v51
  %v273 = vunpack.c.l.b16 %v52
  %v274 = vunpack.c.l.b16 %v53
  %v275 = vpack.c.b16 %v260, %v259
  %v276 = vpack.c.b16 %v262, %v261
  %v277 = vpack.c.b16 %v264, %v263
  %v278 = vpack.c.b16 %v266, %v265
  %v279 = vpack.c.b16 %v268, %v267
  %v280 = vpack.c.b16 %v270, %v269
  %v281 = vpack.c.b16 %v272, %v271
  %v282 = vpack.c.b16 %v274, %v273
  %291 = vmatpush.bf16.msra.mxu0 %v238
  %292 = vmatpush.bf16.msra.mxu0 %v237
  %293 = vmatpush.bf16.msra.mxu0 %v236
  %294 = vmatpush.bf16.msra.mxu0 %v235
  %295 = vmatpush.bf16.msra.mxu0 %v234
  %296 = vmatpush.bf16.msra.mxu0 %v233
  %297 = vmatpush.bf16.msra.mxu0 %v232
  %298 = vmatpush.bf16.msra.mxu0 %v231
  %299 = vmatmul.bf16.gmra.mxu0 %v275
  %v300 = vpop.f32.mrf.mxu0
  %v301 = vadd.f32 %v241, %v300
  %v302 = vpop.f32.mrf.mxu0
  %v303 = vadd.f32 %v241, %v302
  %304 = vmatmul.bf16.gmra.mxu0 %v276
  %v305 = vpop.f32.mrf.mxu0
  %v306 = vadd.f32 %v241, %v305
  %v307 = vpop.f32.mrf.mxu0
  %v308 = vadd.f32 %v241, %v307
  %309 = vmatmul.bf16.gmra.mxu0 %v277
  %v310 = vpop.f32.mrf.mxu0
  %v311 = vadd.f32 %v241, %v310
  %v312 = vpop.f32.mrf.mxu0
  %v313 = vadd.f32 %v241, %v312
  %314 = vmatmul.bf16.gmra.mxu0 %v278
  %v315 = vpop.f32.mrf.mxu0
  %v316 = vadd.f32 %v241, %v315
  %v317 = vpop.f32.mrf.mxu0
  %v318 = vadd.f32 %v241, %v317
  %319 = vmatmul.bf16.gmra.mxu0 %v279
  %v320 = vpop.f32.mrf.mxu0
  %v321 = vadd.f32 %v241, %v320
  %v322 = vpop.f32.mrf.mxu0
  %v323 = vadd.f32 %v241, %v322
  %324 = vmatmul.bf16.gmra.mxu0 %v280
  %v325 = vpop.f32.mrf.mxu0
  %v326 = vadd.f32 %v241, %v325
  %v327 = vpop.f32.mrf.mxu0
  %v328 = vadd.f32 %v241, %v327
  %329 = vmatmul.bf16.gmra.mxu0 %v281
  %v330 = vpop.f32.mrf.mxu0
  %v331 = vadd.f32 %v241, %v330
  %v332 = vpop.f32.mrf.mxu0
  %v333 = vadd.f32 %v241, %v332
  %334 = vmatmul.bf16.gmra.mxu0 %v282
  %v335 = vpop.f32.mrf.mxu0
  %v336 = vadd.f32 %v241, %v335
  %v337 = vpop.f32.mrf.mxu0
  %v338 = vadd.f32 %v241, %v337
  %339 = vdwg.mxu0
  %v340 = vmax.f32 %v301, 0.0
  %v341 = vmax.f32 %v303, 0.0
  %v342 = vmax.f32 %v306, 0.0
  %v343 = vmax.f32 %v308, 0.0
  %v344 = vmax.f32 %v311, 0.0
  %v345 = vmax.f32 %v313, 0.0
  %v346 = vmax.f32 %v316, 0.0
  %v347 = vmax.f32 %v318, 0.0
  %v348 = vmax.f32 %v321, 0.0
  %v349 = vmax.f32 %v323, 0.0
  %v350 = vmax.f32 %v326, 0.0
  %v351 = vmax.f32 %v328, 0.0
  %v352 = vmax.f32 %v331, 0.0
  %v353 = vmax.f32 %v333, 0.0
  %v354 = vmax.f32 %v336, 0.0
  %v355 = vmax.f32 %v338, 0.0
  %v356 = vpack.c.bf16 %v341, %v340
  %v357 = vpack.c.bf16 %v343, %v342
  %v358 = vpack.c.bf16 %v345, %v344
  %v359 = vpack.c.bf16 %v347, %v346
  %v360 = vpack.c.bf16 %v349, %v348
  %v361 = vpack.c.bf16 %v351, %v350
  %v362 = vpack.c.bf16 %v353, %v352
  %v363 = vpack.c.bf16 %v355, %v354
  %v364 = vld [vmem:[%s4] sm:$0xf]
  %v365 = vld [vmem:[%s4 + $0x4] sm:$0xf]
  %v366 = vld [vmem:[%s4 + $0x8] sm:$0xf]
  %v367 = vld [vmem:[%s4 + $0xc] sm:$0xf]
  %v368 = vld [vmem:[%s4 + $0x10] sm:$0xf]
  %v369 = vld [vmem:[%s4 + $0x14] sm:$0xf]
  %v370 = vld [vmem:[%s4 + $0x18] sm:$0xf]
  %v371 = vld [vmem:[%s4 + $0x1c] sm:$0xf]
  %v372 = vld [vmem:[%s4 + $0x20] sm:$0xf]
  %v373 = vld [vmem:[%s4 + $0x24] sm:$0xf]
  %v374 = vld [vmem:[%s4 + $0x28] sm:$0xf]
  %v375 = vld [vmem:[%s4 + $0x2c] sm:$0xf]
  %v376 = vld [vmem:[%s4 + $0x30] sm:$0xf]
  %v377 = vld [vmem:[%s4 + $0x34] sm:$0xf]
  %v378 = vld [vmem:[%s4 + $0x38] sm:$0xf]
  %v379 = vld [vmem:[%s4 + $0x3c] sm:$0xf]
  %v396 = vunpack.c.l.b16 %v364
  %v397 = vunpack.c.l.b16 %v365
  %v398 = vunpack.c.l.b16 %v366
  %v399 = vunpack.c.l.b16 %v367
  %v400 = vunpack.c.l.b16 %v368
  %v401 = vunpack.c.l.b16 %v369
  %v402 = vunpack.c.l.b16 %v370
  %v403 = vunpack.c.l.b16 %v371
  %v404 = vunpack.c.l.b16 %v372
  %v405 = vunpack.c.l.b16 %v373
  %v406 = vunpack.c.l.b16 %v374
  %v407 = vunpack.c.l.b16 %v375
  %v408 = vunpack.c.l.b16 %v376
  %v409 = vunpack.c.l.b16 %v377
  %v410 = vunpack.c.l.b16 %v378
  %v411 = vunpack.c.l.b16 %v379
  %v412 = vpack.c.b16 %v397, %v396
  %v413 = vpack.c.b16 %v399, %v398
  %v414 = vpack.c.b16 %v401, %v400
  %v415 = vpack.c.b16 %v403, %v402
  %v416 = vpack.c.b16 %v405, %v404
  %v417 = vpack.c.b16 %v407, %v406
  %v418 = vpack.c.b16 %v409, %v408
  %v419 = vpack.c.b16 %v411, %v410
  %428 = vmatpush.bf16.msra.mxu0 %v419
  %429 = vmatpush.bf16.msra.mxu0 %v418
  %430 = vmatpush.bf16.msra.mxu0 %v417
  %431 = vmatpush.bf16.msra.mxu0 %v416
  %432 = vmatpush.bf16.msra.mxu0 %v415
  %433 = vmatpush.bf16.msra.mxu0 %v414
  %434 = vmatpush.bf16.msra.mxu0 %v413
  %435 = vmatpush.bf16.msra.mxu0 %v412
  %436 = vmatmul.bf16.gmra.mxu0 %v356
  %v437 = vpop.f32.mrf.mxu0
  %v438 = vadd.f32 0.0, %v437
  %v439 = vpop.f32.mrf.mxu0
  %v440 = vadd.f32 0.0, %v439
  %441 = vmatmul.bf16.gmra.mxu0 %v357
  %v442 = vpop.f32.mrf.mxu0
  %v443 = vadd.f32 0.0, %v442
  %v444 = vpop.f32.mrf.mxu0
  %v445 = vadd.f32 0.0, %v444
  %446 = vmatmul.bf16.gmra.mxu0 %v358
  %v447 = vpop.f32.mrf.mxu0
  %v448 = vadd.f32 0.0, %v447
  %v449 = vpop.f32.mrf.mxu0
  %v450 = vadd.f32 0.0, %v449
  %451 = vmatmul.bf16.gmra.mxu0 %v359
  %v452 = vpop.f32.mrf.mxu0
  %v453 = vadd.f32 0.0, %v452
  %v454 = vpop.f32.mrf.mxu0
  %v455 = vadd.f32 0.0, %v454
  %456 = vmatmul.bf16.gmra.mxu0 %v360
  %v457 = vpop.f32.mrf.mxu0
  %v458 = vadd.f32 0.0, %v457
  %v459 = vpop.f32.mrf.mxu0
  %v460 = vadd.f32 0.0, %v459
  %461 = vmatmul.bf16.gmra.mxu0 %v361
  %v462 = vpop.f32.mrf.mxu0
  %v463 = vadd.f32 0.0, %v462
  %v464 = vpop.f32.mrf.mxu0
  %v465 = vadd.f32 0.0, %v464
  %466 = vmatmul.bf16.gmra.mxu0 %v362
  %v467 = vpop.f32.mrf.mxu0
  %v468 = vadd.f32 0.0, %v467
  %v469 = vpop.f32.mrf.mxu0
  %v470 = vadd.f32 0.0, %v469
  %471 = vmatmul.bf16.gmra.mxu0 %v363
  %v472 = vpop.f32.mrf.mxu0
  %v473 = vadd.f32 0.0, %v472
  %v474 = vpop.f32.mrf.mxu0
  %v475 = vadd.f32 0.0, %v474
  %476 = vdwg.mxu0
  %v477 = vpack.c.bf16 %v440, %v438
  %v478 = vpack.c.bf16 %v445, %v443
  %v479 = vpack.c.bf16 %v450, %v448
  %v480 = vpack.c.bf16 %v455, %v453
  %v481 = vpack.c.bf16 %v460, %v458
  %v482 = vpack.c.bf16 %v465, %v463
  %v483 = vpack.c.bf16 %v470, %v468
  %v484 = vpack.c.bf16 %v475, %v473
  %v485 = vld [vmem:[%s5] sm:$0x1]
  %v487 = vperm.slane %v485, 0
  %489 = vmatpush.bf16.msra.mxu0 %v484
  %490 = vmatpush.bf16.msra.mxu0 %v483
  %491 = vmatpush.bf16.msra.mxu0 %v482
  %492 = vmatpush.bf16.msra.mxu0 %v481
  %493 = vmatpush.bf16.msra.mxu0 %v480
  %494 = vmatpush.bf16.msra.mxu0 %v479
  %495 = vmatpush.bf16.msra.mxu0 %v478
  %496 = vmatpush.bf16.msra.mxu0 %v477
  %497 = vmatmul.bf16.gmra.mxu0 %v275
  %v498 = vpop.f32.mrf.mxu0
  %v499 = vadd.f32 %v487, %v498
  %v500 = vpop.f32.mrf.mxu0
  %v501 = vadd.f32 %v487, %v500
  %502 = vmatmul.bf16.gmra.mxu0 %v276
  %v503 = vpop.f32.mrf.mxu0
  %v504 = vadd.f32 %v487, %v503
  %v505 = vpop.f32.mrf.mxu0
  %v506 = vadd.f32 %v487, %v505
  %507 = vmatmul.bf16.gmra.mxu0 %v277
  %v508 = vpop.f32.mrf.mxu0
  %v509 = vadd.f32 %v487, %v508
  %v510 = vpop.f32.mrf.mxu0
  %v511 = vadd.f32 %v487, %v510
  %512 = vmatmul.bf16.gmra.mxu0 %v278
  %v513 = vpop.f32.mrf.mxu0
  %v514 = vadd.f32 %v487, %v513
  %v515 = vpop.f32.mrf.mxu0
  %v516 = vadd.f32 %v487, %v515
  %517 = vmatmul.bf16.gmra.mxu0 %v279
  %v518 = vpop.f32.mrf.mxu0
  %v519 = vadd.f32 %v487, %v518
  %v520 = vpop.f32.mrf.mxu0
  %v521 = vadd.f32 %v487, %v520
  %522 = vmatmul.bf16.gmra.mxu0 %v280
  %v523 = vpop.f32.mrf.mxu0
  %v524 = vadd.f32 %v487, %v523
  %v525 = vpop.f32.mrf.mxu0
  %v526 = vadd.f32 %v487, %v525
  %527 = vmatmul.bf16.gmra.mxu0 %v281
  %v528 = vpop.f32.mrf.mxu0
  %v529 = vadd.f32 %v487, %v528
  %v530 = vpop.f32.mrf.mxu0
  %v531 = vadd.f32 %v487, %v530
  %532 = vmatmul.bf16.gmra.mxu0 %v282
  %v533 = vpop.f32.mrf.mxu0
  %v534 = vadd.f32 %v487, %v533
  %v535 = vpop.f32.mrf.mxu0
  %v536 = vadd.f32 %v487, %v535
  %537 = vdwg.mxu0
  %v538 = vmax.f32 %v499, 0.0
  %v539 = vmax.f32 %v501, 0.0
  %v540 = vmax.f32 %v504, 0.0
  %v541 = vmax.f32 %v506, 0.0
  %v542 = vmax.f32 %v509, 0.0
  %v543 = vmax.f32 %v511, 0.0
  %v544 = vmax.f32 %v514, 0.0
  %v545 = vmax.f32 %v516, 0.0
  %v546 = vmax.f32 %v519, 0.0
  %v547 = vmax.f32 %v521, 0.0
  %v548 = vmax.f32 %v524, 0.0
  %v549 = vmax.f32 %v526, 0.0
  %v550 = vmax.f32 %v529, 0.0
  %v551 = vmax.f32 %v531, 0.0
  %v552 = vmax.f32 %v534, 0.0
  %v553 = vmax.f32 %v536, 0.0
  %v554 = vpack.c.bf16 %v539, %v538
  %v555 = vpack.c.bf16 %v541, %v540
  %v556 = vpack.c.bf16 %v543, %v542
  %v557 = vpack.c.bf16 %v545, %v544
  %v558 = vpack.c.bf16 %v547, %v546
  %v559 = vpack.c.bf16 %v549, %v548
  %v560 = vpack.c.bf16 %v551, %v550
  %v561 = vpack.c.bf16 %v553, %v552
  %v562 = vld [vmem:[%s6] sm:$0xf]
  %v563 = vld [vmem:[%s6 + $0x4] sm:$0xf]
  %v564 = vld [vmem:[%s6 + $0x8] sm:$0xf]
  %v565 = vld [vmem:[%s6 + $0xc] sm:$0xf]
  %v566 = vld [vmem:[%s6 + $0x10] sm:$0xf]
  %v567 = vld [vmem:[%s6 + $0x14] sm:$0xf]
  %v568 = vld [vmem:[%s6 + $0x18] sm:$0xf]
  %v569 = vld [vmem:[%s6 + $0x1c] sm:$0xf]
  %v570 = vld [vmem:[%s6 + $0x20] sm:$0xf]
  %v571 = vld [vmem:[%s6 + $0x24] sm:$0xf]
  %v572 = vld [vmem:[%s6 + $0x28] sm:$0xf]
  %v573 = vld [vmem:[%s6 + $0x2c] sm:$0xf]
  %v574 = vld [vmem:[%s6 + $0x30] sm:$0xf]
  %v575 = vld [vmem:[%s6 + $0x34] sm:$0xf]
  %v576 = vld [vmem:[%s6 + $0x38] sm:$0xf]
  %v577 = vld [vmem:[%s6 + $0x3c] sm:$0xf]
  %v594 = vunpack.c.l.b16 %v562
  %v595 = vunpack.c.l.b16 %v563
  %v596 = vunpack.c.l.b16 %v564
  %v597 = vunpack.c.l.b16 %v565
  %v598 = vunpack.c.l.b16 %v566
  %v599 = vunpack.c.l.b16 %v567
  %v600 = vunpack.c.l.b16 %v568
  %v601 = vunpack.c.l.b16 %v569
  %v602 = vunpack.c.l.b16 %v570
  %v603 = vunpack.c.l.b16 %v571
  %v604 = vunpack.c.l.b16 %v572
  %v605 = vunpack.c.l.b16 %v573
  %v606 = vunpack.c.l.b16 %v574
  %v607 = vunpack.c.l.b16 %v575
  %v608 = vunpack.c.l.b16 %v576
  %v609 = vunpack.c.l.b16 %v577
  %v610 = vpack.c.b16 %v595, %v594
  %v611 = vpack.c.b16 %v597, %v596
  %v612 = vpack.c.b16 %v599, %v598
  %v613 = vpack.c.b16 %v601, %v600
  %v614 = vpack.c.b16 %v603, %v602
  %v615 = vpack.c.b16 %v605, %v604
  %v616 = vpack.c.b16 %v607, %v606
  %v617 = vpack.c.b16 %v609, %v608
  %626 = vmatpush.bf16.msra.mxu0 %v617
  %627 = vmatpush.bf16.msra.mxu0 %v616
  %628 = vmatpush.bf16.msra.mxu0 %v615
  %629 = vmatpush.bf16.msra.mxu0 %v614
  %630 = vmatpush.bf16.msra.mxu0 %v613
  %631 = vmatpush.bf16.msra.mxu0 %v612
  %632 = vmatpush.bf16.msra.mxu0 %v611
  %633 = vmatpush.bf16.msra.mxu0 %v610
  %634 = vmatmul.bf16.gmra.mxu0 %v554
  %v635 = vpop.f32.mrf.mxu0
  %v636 = vadd.f32 0.0, %v635
  %v637 = vpop.f32.mrf.mxu0
  %v638 = vadd.f32 0.0, %v637
  %639 = vmatmul.bf16.gmra.mxu0 %v555
  %v640 = vpop.f32.mrf.mxu0
  %v641 = vadd.f32 0.0, %v640
  %v642 = vpop.f32.mrf.mxu0
  %v643 = vadd.f32 0.0, %v642
  %644 = vmatmul.bf16.gmra.mxu0 %v556
  %v645 = vpop.f32.mrf.mxu0
  %v646 = vadd.f32 0.0, %v645
  %v647 = vpop.f32.mrf.mxu0
  %v648 = vadd.f32 0.0, %v647
  %649 = vmatmul.bf16.gmra.mxu0 %v557
  %v650 = vpop.f32.mrf.mxu0
  %v651 = vadd.f32 0.0, %v650
  %v652 = vpop.f32.mrf.mxu0
  %v653 = vadd.f32 0.0, %v652
  %654 = vmatmul.bf16.gmra.mxu0 %v558
  %v655 = vpop.f32.mrf.mxu0
  %v656 = vadd.f32 0.0, %v655
  %v657 = vpop.f32.mrf.mxu0
  %v658 = vadd.f32 0.0, %v657
  %659 = vmatmul.bf16.gmra.mxu0 %v559
  %v660 = vpop.f32.mrf.mxu0
  %v661 = vadd.f32 0.0, %v660
  %v662 = vpop.f32.mrf.mxu0
  %v663 = vadd.f32 0.0, %v662
  %664 = vmatmul.bf16.gmra.mxu0 %v560
  %v665 = vpop.f32.mrf.mxu0
  %v666 = vadd.f32 0.0, %v665
  %v667 = vpop.f32.mrf.mxu0
  %v668 = vadd.f32 0.0, %v667
  %669 = vmatmul.bf16.gmra.mxu0 %v561
  %v670 = vpop.f32.mrf.mxu0
  %v671 = vadd.f32 0.0, %v670
  %v672 = vpop.f32.mrf.mxu0
  %v673 = vadd.f32 0.0, %v672
  %674 = vdwg.mxu0
  %v675 = vpack.c.bf16 %v638, %v636
  %v676 = vpack.c.bf16 %v643, %v641
  %v677 = vpack.c.bf16 %v648, %v646
  %v678 = vpack.c.bf16 %v653, %v651
  %v679 = vpack.c.bf16 %v658, %v656
  %v680 = vpack.c.bf16 %v663, %v661
  %v681 = vpack.c.bf16 %v668, %v666
  %v682 = vpack.c.bf16 %v673, %v671
  %v683 = vld [vmem:[%s7] sm:$0x1]
  %v685 = vperm.slane %v683, 0
  %687 = vmatpush.bf16.msra.mxu0 %v682
  %688 = vmatpush.bf16.msra.mxu0 %v681
  %689 = vmatpush.bf16.msra.mxu0 %v680
  %690 = vmatpush.bf16.msra.mxu0 %v679
  %691 = vmatpush.bf16.msra.mxu0 %v678
  %692 = vmatpush.bf16.msra.mxu0 %v677
  %693 = vmatpush.bf16.msra.mxu0 %v676
  %694 = vmatpush.bf16.msra.mxu0 %v675
  %695 = vmatmul.bf16.gmra.mxu0 %v275
  %v696 = vpop.f32.mrf.mxu0
  %v697 = vadd.f32 %v685, %v696
  %v698 = vpop.f32.mrf.mxu0
  %v699 = vadd.f32 %v685, %v698
  %700 = vmatmul.bf16.gmra.mxu0 %v276
  %v701 = vpop.f32.mrf.mxu0
  %v702 = vadd.f32 %v685, %v701
  %v703 = vpop.f32.mrf.mxu0
  %v704 = vadd.f32 %v685, %v703
  %705 = vmatmul.bf16.gmra.mxu0 %v277
  %v706 = vpop.f32.mrf.mxu0
  %v707 = vadd.f32 %v685, %v706
  %v708 = vpop.f32.mrf.mxu0
  %v709 = vadd.f32 %v685, %v708
  %710 = vmatmul.bf16.gmra.mxu0 %v278
  %v711 = vpop.f32.mrf.mxu0
  %v712 = vadd.f32 %v685, %v711
  %v713 = vpop.f32.mrf.mxu0
  %v714 = vadd.f32 %v685, %v713
  %715 = vmatmul.bf16.gmra.mxu0 %v279
  %v716 = vpop.f32.mrf.mxu0
  %v717 = vadd.f32 %v685, %v716
  %v718 = vpop.f32.mrf.mxu0
  %v719 = vadd.f32 %v685, %v718
  %720 = vmatmul.bf16.gmra.mxu0 %v280
  %v721 = vpop.f32.mrf.mxu0
  %v722 = vadd.f32 %v685, %v721
  %v723 = vpop.f32.mrf.mxu0
  %v724 = vadd.f32 %v685, %v723
  %725 = vmatmul.bf16.gmra.mxu0 %v281
  %v726 = vpop.f32.mrf.mxu0
  %v727 = vadd.f32 %v685, %v726
  %v728 = vpop.f32.mrf.mxu0
  %v729 = vadd.f32 %v685, %v728
  %730 = vmatmul.bf16.gmra.mxu0 %v282
  %v731 = vpop.f32.mrf.mxu0
  %v732 = vadd.f32 %v685, %v731
  %v733 = vpop.f32.mrf.mxu0
  %v734 = vadd.f32 %v685, %v733
  %735 = vdwg.mxu0
  %v736 = vmax.f32 %v697, 0.0
  %v737 = vmax.f32 %v699, 0.0
  %v738 = vmax.f32 %v702, 0.0
  %v739 = vmax.f32 %v704, 0.0
  %v740 = vmax.f32 %v707, 0.0
  %v741 = vmax.f32 %v709, 0.0
  %v742 = vmax.f32 %v712, 0.0
  %v743 = vmax.f32 %v714, 0.0
  %v744 = vmax.f32 %v717, 0.0
  %v745 = vmax.f32 %v719, 0.0
  %v746 = vmax.f32 %v722, 0.0
  %v747 = vmax.f32 %v724, 0.0
  %v748 = vmax.f32 %v727, 0.0
  %v749 = vmax.f32 %v729, 0.0
  %v750 = vmax.f32 %v732, 0.0
  %v751 = vmax.f32 %v734, 0.0
  %v752 = vld [vmem:[%s8] sm:$0xf]
  %v753 = vpack.c.bf16 %v737, %v736
  %v754 = vpack.c.bf16 %v739, %v738
  %v755 = vpack.c.bf16 %v741, %v740
  %v756 = vpack.c.bf16 %v743, %v742
  %v757 = vpack.c.bf16 %v745, %v744
  %v758 = vpack.c.bf16 %v747, %v746
  %v759 = vpack.c.bf16 %v749, %v748
  %v760 = vpack.c.bf16 %v751, %v750
  %761 = vmatpush.bf16.msra.mxu0 %v760
  %762 = vmatpush.bf16.msra.mxu0 %v759
  %763 = vmatpush.bf16.msra.mxu0 %v758
  %764 = vmatpush.bf16.msra.mxu0 %v757
  %765 = vmatpush.bf16.msra.mxu0 %v756
  %766 = vmatpush.bf16.msra.mxu0 %v755
  %767 = vmatpush.bf16.msra.mxu0 %v754
  %768 = vmatpush.bf16.msra.mxu0 %v753
  %769 = vmatmul.bf16.gmra.mxu0 %v752
  %v770 = vpop.f32.mrf.mxu0
  %v771 = vadd.f32 0.0, %v770
  %v772 = vpop.f32.mrf.mxu0
  %773 = vdwg.mxu0
  %v774 = vpack.c.bf16 %v771, %v771
  %v775 = vld [vmem:[%s9] sm:$0xf]
  %v776 = vld [vmem:[%s9 + $0x4] sm:$0xf]
  %v777 = vld [vmem:[%s9 + $0x8] sm:$0xf]
  %v778 = vld [vmem:[%s9 + $0xc] sm:$0xf]
  %v779 = vld [vmem:[%s9 + $0x10] sm:$0xf]
  %v780 = vld [vmem:[%s9 + $0x14] sm:$0xf]
  %v781 = vld [vmem:[%s9 + $0x18] sm:$0xf]
  %v782 = vld [vmem:[%s9 + $0x1c] sm:$0xf]
  %v783 = vld [vmem:[%s9 + $0x20] sm:$0xf]
  %v784 = vld [vmem:[%s9 + $0x24] sm:$0xf]
  %v785 = vld [vmem:[%s9 + $0x28] sm:$0xf]
  %v786 = vld [vmem:[%s9 + $0x2c] sm:$0xf]
  %v787 = vld [vmem:[%s9 + $0x30] sm:$0xf]
  %v788 = vld [vmem:[%s9 + $0x34] sm:$0xf]
  %v789 = vld [vmem:[%s9 + $0x38] sm:$0xf]
  %v790 = vld [vmem:[%s9 + $0x3c] sm:$0xf]
  %v791 = vld [vmem:[%s10] sm:$0x1]
  %v793 = vperm.slane %v791, 0
  %v811 = vunpack.c.l.b16 %v775
  %v812 = vunpack.c.l.b16 %v776
  %v813 = vunpack.c.l.b16 %v777
  %v814 = vunpack.c.l.b16 %v778
  %v815 = vunpack.c.l.b16 %v779
  %v816 = vunpack.c.l.b16 %v780
  %v817 = vunpack.c.l.b16 %v781
  %v818 = vunpack.c.l.b16 %v782
  %v819 = vunpack.c.l.b16 %v783
  %v820 = vunpack.c.l.b16 %v784
  %v821 = vunpack.c.l.b16 %v785
  %v822 = vunpack.c.l.b16 %v786
  %v823 = vunpack.c.l.b16 %v787
  %v824 = vunpack.c.l.b16 %v788
  %v825 = vunpack.c.l.b16 %v789
  %v826 = vunpack.c.l.b16 %v790
  %v827 = vpack.c.b16 %v812, %v811
  %v828 = vpack.c.b16 %v814, %v813
  %v829 = vpack.c.b16 %v816, %v815
  %v830 = vpack.c.b16 %v818, %v817
  %v831 = vpack.c.b16 %v820, %v819
  %v832 = vpack.c.b16 %v822, %v821
  %v833 = vpack.c.b16 %v824, %v823
  %v834 = vpack.c.b16 %v826, %v825
  %843 = vmatpush.bf16.msra.mxu0 %v834
  %844 = vmatpush.bf16.msra.mxu0 %v833
  %845 = vmatpush.bf16.msra.mxu0 %v832
  %846 = vmatpush.bf16.msra.mxu0 %v831
  %847 = vmatpush.bf16.msra.mxu0 %v830
  %848 = vmatpush.bf16.msra.mxu0 %v829
  %849 = vmatpush.bf16.msra.mxu0 %v828
  %850 = vmatpush.bf16.msra.mxu0 %v827
  %851 = vmatmul.bf16.gmra.mxu0 %v774
  %v852 = vpop.f32.mrf.mxu0
  %v853 = vadd.f32 %v793, %v852
  %v854 = vpop.f32.mrf.mxu0
  %855 = vdwg.mxu0
  %856 = vst [vmem:[%s11] sm:$0xff] %v853
  // Predicated region
  $region46: #{gnn_forward.1} parent=0 // pred_check
    _
  $region47: #{gnn_forward.1} parent=0 // pred_check_branch
    %858 = sbr.rel (0) target = $region49
  $region48: #{gnn_forward.1} parent=0 // pred_region
    _
  $region49: #{gnn_forward.1} parent=0 // pred_fallthru
    _
  // Predicated region
  $region50: #{gnn_forward.1} parent=0 // pred_check
    _
  $region51: #{gnn_forward.1} parent=0 // pred_check_branch
    %860 = sbr.rel (0) target = $region53
  $region52: #{gnn_forward.1} parent=0 // pred_region
    _
  $region53: #{gnn_forward.1} parent=0 // pred_fallthru
    _

</llo_original>
